<compile_context>
chip_gen: v7x
topology: tpu7x:2x2x1
jax: 0.10.0
libtpu: 0.0.40
codegen_flags: <defaults>
</compile_context>

<pallas_src>
import functools

import numpy as np
import jax
import jax.numpy as jnp
from jax.experimental import pallas as pl
from jax.experimental.pallas import tpu as pltpu


def _round_up(x: int, m: int) -> int:
    return (x + m - 1) // m * m


def hann_window(L: int) -> np.ndarray:
    """torch.hann_window(L, periodic=False) equivalent (float64)."""
    n = np.arange(L, dtype=np.float64)
    return 0.5 * (1.0 - np.cos(2.0 * np.pi * n / (L - 1)))


def _build_fused_basis(n_fft: int, win_length: int, normalized: str):
    """Fused RHS [win_length, 2*NBP]: window * (cos | -sin) * inv_norm, zero-padded."""
    nbins = n_fft // 2 + 1
    NBP = _round_up(nbins, 128)
    # TODO(synk): only the default 'hann' window family is ported; the tukey /
    # planck-taper / kaiser / bisquare constructors would be folded in the same way.
    w = hann_window(win_length)
    if normalized == 'amplitude':
        norm = float(np.sqrt(np.sum(w ** 2)))
    elif normalized == 'energy':
        norm = float(np.mean(w ** 2))
    else:
        norm = 1.0
    inv = 1.0 / norm
    j = np.arange(win_length, dtype=np.float64)[:, None]
    k = np.arange(nbins, dtype=np.float64)[None, :]
    ang = 2.0 * np.pi * j * k / float(n_fft)
    valid = (j < n_fft).astype(np.float64)   # rfft(n=n_fft) truncates if win > n_fft
    W = np.zeros((win_length, 2 * NBP), dtype=np.float64)
    W[:, :nbins] = w[:, None] * np.cos(ang) * valid * inv
    W[:, NBP:NBP + nbins] = w[:, None] * (-np.sin(ang)) * valid * inv
    return W.astype(np.float32), nbins, NBP


# -------------------------------- kernel ----------------------------------- #

def _stft_kernel(frames_ref, wh_ref, wl_ref, out_ref):
    x = frames_ref[...]                                        # [TM, K] f32
    x_hi = x.astype(jnp.bfloat16)
    x_lo = (x - x_hi.astype(jnp.float32)).astype(jnp.bfloat16)
    wh = wh_ref[...]                                           # [K, 2*NBP] bf16
    wl = wl_ref[...]
    acc = jnp.dot(x_hi, wh, preferred_element_type=jnp.float32)
    acc = acc + jnp.dot(x_lo, wh, preferred_element_type=jnp.float32)
    acc = acc + jnp.dot(x_hi, wl, preferred_element_type=jnp.float32)
    out_ref[...] = acc


# ------------------------------- wrapper ------------------------------------ #

def vectorized_stft(x,
                    n_fft: int = 128,
                    win_length: int = 128,
                    hop_length: int = 32,
                    center: bool = True,
                    normalized: str = 'energy',
                    pad_mode: str = 'reflect'):
    """JAX/Pallas port of VectorizedSTFT.forward.

    Args:
        x: [batch, channels, time] float32.
    Returns:
        complex64 [batch, channels, num_frames, n_fft//2 + 1]
    """
    batch, channels, _ = x.shape
    x = x.astype(jnp.float32)

    if center:
        pad = n_fft // 2
        jnp_mode = {'reflect': 'reflect', 'replicate': 'edge',
                    'circular': 'wrap', 'constant': 'constant',
                    'zeros': 'constant'}.get(pad_mode, pad_mode)
        x = jnp.pad(x, ((0, 0), (0, 0), (pad, pad)), mode=jnp_mode)

    T = x.shape[-1]
    num_frames = 1 + (T - win_length) // hop_length

    # ---- unfold without an XLA gather (reshape + static slices + concat) ----
    if win_length % hop_length == 0:
        ratio = win_length // hop_length
        n_hops = num_frames + ratio - 1
        xs = x[..., :n_hops * hop_length]
        xs3 = xs.reshape(batch, channels, n_hops, hop_length)
        frames = jnp.concatenate(
            [xs3[:, :, q:q + num_frames, :] for q in range(ratio)], axis=-1)
    else:  # fallback gather for non-divisible hop
        idx = (jnp.arange(num_frames)[:, None] * hop_length
               + jnp.arange(win_length)[None, :])
        frames = x[:, :, idx]
    # frames: [B, C, num_frames, win_length]

    M = batch * channels * num_frames
    frames2d = frames.reshape(M, win_length)

    # ---- tile M (rows): multiple of 8, padded to a multiple of the tile ----
    TM = min(1024, _round_up(M, 8))
    M_pad = _round_up(M, TM)
    if M_pad != M:
        frames2d = jnp.pad(frames2d, ((0, M_pad - M), (0, 0)))

    # ---- fused, windowed, normalized DFT basis (lane-dense, bf16 hi/lo) ----
    W_np, nbins, NBP = _build_fused_basis(n_fft, win_length, normalized)
    W = jnp.asarray(W_np)
    W_hi = W.astype(jnp.bfloat16)
    W_lo = (W - W_hi.astype(jnp.float32)).astype(jnp.bfloat16)

    K = win_length
    NOUT = 2 * NBP
    grid = (M_pad // TM,)

    cost = pl.CostEstimate(
        flops=3 * 2 * M_pad * K * NOUT,
        transcendentals=0,
        bytes_accessed=M_pad * K * 4 + 2 * K * NOUT * 2 + M_pad * NOUT * 4)

    out = pl.pallas_call(
        _stft_kernel,
        out_shape=jax.ShapeDtypeStruct((M_pad, NOUT), jnp.float32),
        grid=grid,
        in_specs=[
            pl.BlockSpec((TM, K), lambda i: (i, 0)),      # frame rows (tiled)
            pl.BlockSpec((K, NOUT), lambda i: (0, 0)),    # W_hi (stays resident)
            pl.BlockSpec((K, NOUT), lambda i: (0, 0)),    # W_lo (stays resident)
        ],
        out_specs=pl.BlockSpec((TM, NOUT), lambda i: (i, 0)),
        compiler_params=pltpu.CompilerParams(
            dimension_semantics=("parallel",)),
        cost_estimate=cost,
    )(frames2d, W_hi, W_lo)

    re = out[:M, :nbins]
    im = out[:M, NBP:NBP + nbins]
    stft = jax.lax.complex(re, im)
    return stft.reshape(batch, channels, num_frames, nbins)


# --------------------------------- main ------------------------------------- #

if __name__ == "__main__":
    key = jax.random.PRNGKey(0)
    batch, channels, time_len = 2, 4, 256
    n_fft = win_length = 128
    hop_length = 32

    x = jax.random.normal(key, (batch, channels, time_len), dtype=jnp.float32)

    stft_fn = jax.jit(functools.partial(
        vectorized_stft, n_fft=n_fft, win_length=win_length,
        hop_length=hop_length, center=True, normalized='energy',
        pad_mode='reflect'))
    out = jax.block_until_ready(stft_fn(x))

    # lightweight correctness check vs. a pure-JAX reference
    pad = n_fft // 2
    xp = jnp.pad(x, ((0, 0), (0, 0), (pad, pad)), mode='reflect')
    nf = 1 + (xp.shape[-1] - win_length) // hop_length
    idx = jnp.arange(nf)[:, None] * hop_length + jnp.arange(win_length)[None, :]
    w = hann_window(win_length)
    ref_frames = xp[:, :, idx] * jnp.asarray(w.astype(np.float32))
    ref = jnp.fft.rfft(ref_frames, n=n_fft, axis=-1)
    ref = ref / float(np.mean(w ** 2))

    assert out.shape == (batch, channels, nf, n_fft // 2 + 1)
    assert out.dtype == jnp.complex64
    err = float(jnp.max(jnp.abs(out - ref)))
    assert err < 1e-2, f"max abs error too large: {err}"

    print("KERNEL_OK")
</pallas_src>

<mosaic_0001>
module attributes {stable_mosaic.version = 11 : i64} {
  func.func @_stft_kernel(%arg0: i32, %arg1: memref<72x128xf32, #tpu.memory_space<vmem>>, %arg2: memref<128x256xbf16, #tpu.memory_space<vmem>>, %arg3: memref<128x256xbf16, #tpu.memory_space<vmem>>, %arg4: memref<72x256xf32, #tpu.memory_space<vmem>>) attributes {dimension_semantics = [#tpu.dimension_semantics<parallel>], iteration_bounds = array<i64: 1>, scalar_prefetch = 0 : i64, scratch_operands = 0 : i64, tpu.core_type = #tpu.core_type<tc>, window_params = [{transform_indices = @transform_0, window_bounds = array<i64: 72, 128>}, {pipeline_mode = #tpu.pipeline_mode<synchronous>, transform_indices = @transform_1, window_bounds = array<i64: 128, 256>}, {pipeline_mode = #tpu.pipeline_mode<synchronous>, transform_indices = @transform_2, window_bounds = array<i64: 128, 256>}, {transform_indices = @transform_3, window_bounds = array<i64: 72, 256>}]} {
    %c0 = arith.constant 0 : index
    %c0_0 = arith.constant 0 : index
    %0 = vector.load %arg1[%c0, %c0_0] : memref<72x128xf32, #tpu.memory_space<vmem>>, vector<72x128xf32>
    %1 = arith.truncf %0 : vector<72x128xf32> to vector<72x128xbf16>
    %2 = arith.extf %1 : vector<72x128xbf16> to vector<72x128xf32>
    %3 = arith.subf %0, %2 : vector<72x128xf32>
    %4 = arith.truncf %3 : vector<72x128xf32> to vector<72x128xbf16>
    %c0_1 = arith.constant 0 : index
    %c0_2 = arith.constant 0 : index
    %5 = vector.load %arg2[%c0_1, %c0_2] : memref<128x256xbf16, #tpu.memory_space<vmem>>, vector<128x256xbf16>
    %c0_3 = arith.constant 0 : index
    %c0_4 = arith.constant 0 : index
    %6 = vector.load %arg3[%c0_3, %c0_4] : memref<128x256xbf16, #tpu.memory_space<vmem>>, vector<128x256xbf16>
    %cst = arith.constant dense<0.000000e+00> : vector<72x256xf32>
    %7 = tpu.matmul %1, %5, %cst {dimension_numbers = #tpu.dot_dimension_numbers<[1], [0], [0], [1], [0, 0, 1, 1], [], []>} : vector<72x128xbf16>, vector<128x256xbf16>, vector<72x256xf32> -> vector<72x256xf32>
    %cst_5 = arith.constant dense<0.000000e+00> : vector<72x256xf32>
    %8 = tpu.matmul %4, %5, %cst_5 {dimension_numbers = #tpu.dot_dimension_numbers<[1], [0], [0], [1], [0, 0, 1, 1], [], []>} : vector<72x128xbf16>, vector<128x256xbf16>, vector<72x256xf32> -> vector<72x256xf32>
    %9 = arith.addf %7, %8 : vector<72x256xf32>
    %cst_6 = arith.constant dense<0.000000e+00> : vector<72x256xf32>
    %10 = tpu.matmul %1, %6, %cst_6 {dimension_numbers = #tpu.dot_dimension_numbers<[1], [0], [0], [1], [0, 0, 1, 1], [], []>} : vector<72x128xbf16>, vector<128x256xbf16>, vector<72x256xf32> -> vector<72x256xf32>
    %11 = arith.addf %9, %10 : vector<72x256xf32>
    %c0_7 = arith.constant 0 : index
    %c0_8 = arith.constant 0 : index
    %12 = vector.load %arg4[%c0_7, %c0_8] : memref<72x256xf32, #tpu.memory_space<vmem>>, vector<72x256xf32>
    tpu.vector_store %arg4[%c0_7, %c0_8], %11 {strides = array<i32>} : memref<72x256xf32, #tpu.memory_space<vmem>>, vector<72x256xf32>,
    return
  }
  func.func @transform_0(%arg0: i32) -> (i32, i32) {
    %c0_i32 = arith.constant 0 : i32
    %c0_i32_0 = arith.constant 0 : i32
    return %arg0, %c0_i32 : i32, i32
  }
  func.func @transform_1(%arg0: i32) -> (i32, i32) {
    %c0_i32 = arith.constant 0 : i32
    %c0_i32_0 = arith.constant 0 : i32
    %c0_i32_1 = arith.constant 0 : i32
    return %c0_i32, %c0_i32_0 : i32, i32
  }
  func.func @transform_2(%arg0: i32) -> (i32, i32) {
    %c0_i32 = arith.constant 0 : i32
    %c0_i32_0 = arith.constant 0 : i32
    %c0_i32_1 = arith.constant 0 : i32
    return %c0_i32, %c0_i32_0 : i32, i32
  }
  func.func @transform_3(%arg0: i32) -> (i32, i32) {
    %c0_i32 = arith.constant 0 : i32
    %c0_i32_0 = arith.constant 0 : i32
    return %arg0, %c0_i32 : i32, i32
  }
}

</mosaic_0001>

<llo_original>
// kernel: custom-call
$region0: #{custom-call}
  %s0 = inlined_call_operand.vmem [shape: f32[2,4,9,65], index: 0, kind: input, shape index: {}]
  %s1 = inlined_call_operand.vmem [shape: f32[2,4,9,65], index: 1, kind: input, shape index: {}]
  %s2 = inlined_call_operand.vmem [shape: c64[2,4,9,65], index: 2, kind: output, shape index: {}]
  %s4 = scalar_lea.vmem %s2, 128
  %v5 = vld [vmem:[%s0] sm:$0xff]
  %6 = vst [vmem:[%s2] sm:$0xff] %v5
  %s7 = scalar_lea.vmem %s2, 8
  %s8 = scalar_lea.vmem %s0, 8
  %v9 = vld [vmem:[%s8] sm:$0xff]
  %10 = vst [vmem:[%s7] sm:$0xff] %v9
  %s11 = scalar_lea.vmem %s2, 16
  %s12 = scalar_lea.vmem %s0, 16
  %v13 = vld [vmem:[%s12] sm:$0xff]
  %14 = vst [vmem:[%s11] sm:$0xff] %v13
  %s15 = scalar_lea.vmem %s2, 24
  %s16 = scalar_lea.vmem %s0, 24
  %v17 = vld [vmem:[%s16] sm:$0xff]
  %18 = vst [vmem:[%s15] sm:$0xff] %v17
  %s19 = scalar_lea.vmem %s2, 32
  %s20 = scalar_lea.vmem %s0, 32
  %v21 = vld [vmem:[%s20] sm:$0xff]
  %22 = vst [vmem:[%s19] sm:$0xff] %v21
  %s23 = scalar_lea.vmem %s2, 40
  %s24 = scalar_lea.vmem %s0, 40
  %v25 = vld [vmem:[%s24] sm:$0xff]
  %26 = vst [vmem:[%s23] sm:$0xff] %v25
  %s27 = scalar_lea.vmem %s2, 48
  %s28 = scalar_lea.vmem %s0, 48
  %v29 = vld [vmem:[%s28] sm:$0xff]
  %30 = vst [vmem:[%s27] sm:$0xff] %v29
  %s31 = scalar_lea.vmem %s2, 56
  %s32 = scalar_lea.vmem %s0, 56
  %v33 = vld [vmem:[%s32] sm:$0xff]
  %34 = vst [vmem:[%s31] sm:$0xff] %v33
  %s35 = scalar_lea.vmem %s2, 64
  %s36 = scalar_lea.vmem %s0, 64
  %v37 = vld [vmem:[%s36] sm:$0xff]
  %38 = vst [vmem:[%s35] sm:$0xff] %v37
  %s39 = scalar_lea.vmem %s2, 72
  %s40 = scalar_lea.vmem %s0, 72
  %v41 = vld [vmem:[%s40] sm:$0xff]
  %42 = vst [vmem:[%s39] sm:$0xff] %v41
  %s43 = scalar_lea.vmem %s2, 80
  %s44 = scalar_lea.vmem %s0, 80
  %v45 = vld [vmem:[%s44] sm:$0xff]
  %46 = vst [vmem:[%s43] sm:$0xff] %v45
  %s47 = scalar_lea.vmem %s2, 88
  %s48 = scalar_lea.vmem %s0, 88
  %v49 = vld [vmem:[%s48] sm:$0xff]
  %50 = vst [vmem:[%s47] sm:$0xff] %v49
  %s51 = scalar_lea.vmem %s2, 96
  %s52 = scalar_lea.vmem %s0, 96
  %v53 = vld [vmem:[%s52] sm:$0xff]
  %54 = vst [vmem:[%s51] sm:$0xff] %v53
  %s55 = scalar_lea.vmem %s2, 104
  %s56 = scalar_lea.vmem %s0, 104
  %v57 = vld [vmem:[%s56] sm:$0xff]
  %58 = vst [vmem:[%s55] sm:$0xff] %v57
  %s59 = scalar_lea.vmem %s2, 112
  %s60 = scalar_lea.vmem %s0, 112
  %v61 = vld [vmem:[%s60] sm:$0xff]
  %62 = vst [vmem:[%s59] sm:$0xff] %v61
  %s63 = scalar_lea.vmem %s2, 120
  %s64 = scalar_lea.vmem %s0, 120
  %v65 = vld [vmem:[%s64] sm:$0xff]
  %66 = vst [vmem:[%s63] sm:$0xff] %v65
  %v67 = vld [vmem:[%s1] sm:$0xff]
  %68 = vst [vmem:[%s4] sm:$0xff] %v67
  %s69 = scalar_lea.vmem %s4, 8
  %s70 = scalar_lea.vmem %s1, 8
  %v71 = vld [vmem:[%s70] sm:$0xff]
  %72 = vst [vmem:[%s69] sm:$0xff] %v71
  %s73 = scalar_lea.vmem %s4, 16
  %s74 = scalar_lea.vmem %s1, 16
  %v75 = vld [vmem:[%s74] sm:$0xff]
  %76 = vst [vmem:[%s73] sm:$0xff] %v75
  %s77 = scalar_lea.vmem %s4, 24
  %s78 = scalar_lea.vmem %s1, 24
  %v79 = vld [vmem:[%s78] sm:$0xff]
  %80 = vst [vmem:[%s77] sm:$0xff] %v79
  %s81 = scalar_lea.vmem %s4, 32
  %s82 = scalar_lea.vmem %s1, 32
  %v83 = vld [vmem:[%s82] sm:$0xff]
  %84 = vst [vmem:[%s81] sm:$0xff] %v83
  %s85 = scalar_lea.vmem %s4, 40
  %s86 = scalar_lea.vmem %s1, 40
  %v87 = vld [vmem:[%s86] sm:$0xff]
  %88 = vst [vmem:[%s85] sm:$0xff] %v87
  %s89 = scalar_lea.vmem %s4, 48
  %s90 = scalar_lea.vmem %s1, 48
  %v91 = vld [vmem:[%s90] sm:$0xff]
  %92 = vst [vmem:[%s89] sm:$0xff] %v91
  %s93 = scalar_lea.vmem %s4, 56
  %s94 = scalar_lea.vmem %s1, 56
  %v95 = vld [vmem:[%s94] sm:$0xff]
  %96 = vst [vmem:[%s93] sm:$0xff] %v95
  %s97 = scalar_lea.vmem %s4, 64
  %s98 = scalar_lea.vmem %s1, 64
  %v99 = vld [vmem:[%s98] sm:$0xff]
  %100 = vst [vmem:[%s97] sm:$0xff] %v99
  %s101 = scalar_lea.vmem %s4, 72
  %s102 = scalar_lea.vmem %s1, 72
  %v103 = vld [vmem:[%s102] sm:$0xff]
  %104 = vst [vmem:[%s101] sm:$0xff] %v103
  %s105 = scalar_lea.vmem %s4, 80
  %s106 = scalar_lea.vmem %s1, 80
  %v107 = vld [vmem:[%s106] sm:$0xff]
  %108 = vst [vmem:[%s105] sm:$0xff] %v107
  %s109 = scalar_lea.vmem %s4, 88
  %s110 = scalar_lea.vmem %s1, 88
  %v111 = vld [vmem:[%s110] sm:$0xff]
  %112 = vst [vmem:[%s109] sm:$0xff] %v111
  %s113 = scalar_lea.vmem %s4, 96
  %s114 = scalar_lea.vmem %s1, 96
  %v115 = vld [vmem:[%s114] sm:$0xff]
  %116 = vst [vmem:[%s113] sm:$0xff] %v115
  %s117 = scalar_lea.vmem %s4, 104
  %s118 = scalar_lea.vmem %s1, 104
  %v119 = vld [vmem:[%s118] sm:$0xff]
  %120 = vst [vmem:[%s117] sm:$0xff] %v119
  %s121 = scalar_lea.vmem %s4, 112
  %s122 = scalar_lea.vmem %s1, 112
  %v123 = vld [vmem:[%s122] sm:$0xff]
  %124 = vst [vmem:[%s121] sm:$0xff] %v123
  %s125 = scalar_lea.vmem %s4, 120
  %s126 = scalar_lea.vmem %s1, 120
  %v127 = vld [vmem:[%s126] sm:$0xff]
  %128 = vst [vmem:[%s125] sm:$0xff] %v127

// kernel: vectorized_stft.1
$region0: #{vectorized_stft.1}
  #allocation0 [shape = 'u32[]', space=smem, size = 0x4, offset = 0x4, fixed_abs, tag = 'smem constant byte address 0x4 - core index']
  #allocation1 [shape = 'u32[144,128]{1,0:T(1,128)}', space=vmem, size = 0x12000, scoped, tag = 'internal scratch']
  %s0 = inlined_call_operand.vmem [shape: f32[72,128], index: 0, kind: input, shape index: {}]
  %s1 = inlined_call_operand.vmem [shape: bf16[128,256], index: 1, kind: input, shape index: {}]
  %s2 = inlined_call_operand.vmem [shape: bf16[128,256], index: 2, kind: input, shape index: {}]
  %s3 = inlined_call_operand.vmem [shape: f32[72,256], index: 3, kind: output, shape index: {}]
  %s4 = sld [smem:[#allocation0]]
  $region22: #{vectorized_stft.1} parent=0
    _
  %s6 = ssub.s32 1, %s4
  %s7 = scalar_select 0, %s6, %s4
  // Predicated region
  $region2: #{vectorized_stft.1} parent=0 // pred_check
    _
  $region3: #{vectorized_stft.1} parent=0 // pred_check_branch
    %9 = sbr.rel (0) target = $region5
  $region4: #{vectorized_stft.1} parent=0 // pred_region
    _
  $region5: #{vectorized_stft.1} parent=0 // pred_fallthru
    _
  // Predicated region
  $region6: #{vectorized_stft.1} parent=0 // pred_check
    _
  $region7: #{vectorized_stft.1} parent=0 // pred_check_branch
    %11 = sbr.rel (0) target = $region9
  $region8: #{vectorized_stft.1} parent=0 // pred_region
    _
  $region9: #{vectorized_stft.1} parent=0 // pred_fallthru
    _
  // Predicated region
  $region10: #{vectorized_stft.1} parent=0 // pred_check
    _
  $region11: #{vectorized_stft.1} parent=0 // pred_check_branch
    %13 = sbr.rel (0) target = $region13
  $region12: #{vectorized_stft.1} parent=0 // pred_region
    _
  $region13: #{vectorized_stft.1} parent=0 // pred_fallthru
    _
  %v15 = vld [vmem:[%s0] sm:$0xff]
  %v16 = vld [vmem:[%s0 + $0x8] sm:$0xff]
  %v17 = vld [vmem:[%s0 + $0x10] sm:$0xff]
  %v18 = vld [vmem:[%s0 + $0x18] sm:$0xff]
  %v19 = vld [vmem:[%s0 + $0x20] sm:$0xff]
  %v20 = vld [vmem:[%s0 + $0x28] sm:$0xff]
  %v21 = vld [vmem:[%s0 + $0x30] sm:$0xff]
  %v22 = vld [vmem:[%s0 + $0x38] sm:$0xff]
  %v23 = vld [vmem:[%s0 + $0x40] sm:$0xff]
  %v24 = vpack.c.bf16 %v16, %v15
  %v25 = vpack.c.bf16 %v18, %v17
  %v26 = vpack.c.bf16 %v20, %v19
  %v27 = vpack.c.bf16 %v22, %v21
  %v28 = vpack.c.bf16 %v23, %v23
  %v29 = vunpack.c.l.bf16 %v24
  %v30 = vunpack.c.h.bf16 %v24
  %v31 = vunpack.c.l.bf16 %v25
  %v32 = vunpack.c.h.bf16 %v25
  %v33 = vunpack.c.l.bf16 %v26
  %v34 = vunpack.c.h.bf16 %v26
  %v35 = vunpack.c.l.bf16 %v27
  %v36 = vunpack.c.h.bf16 %v27
  %v37 = vunpack.c.l.bf16 %v28
  %v38 = vsub.f32 %v15, %v29
  %v39 = vsub.f32 %v16, %v30
  %v40 = vsub.f32 %v17, %v31
  %v41 = vsub.f32 %v18, %v32
  %v42 = vsub.f32 %v19, %v33
  %v43 = vsub.f32 %v20, %v34
  %v44 = vsub.f32 %v21, %v35
  %v45 = vsub.f32 %v22, %v36
  %v46 = vsub.f32 %v23, %v37
  %v47 = vpack.c.bf16 %v39, %v38
  %v48 = vpack.c.bf16 %v41, %v40
  %v49 = vpack.c.bf16 %v43, %v42
  %v50 = vpack.c.bf16 %v45, %v44
  %v51 = vpack.c.bf16 %v46, %v46
  %v52 = vld [vmem:[%s1] sm:$0xff]
  %v53 = vld [vmem:[%s1 + $0x8] sm:$0xff]
  %v54 = vld [vmem:[%s1 + $0x10] sm:$0xff]
  %v55 = vld [vmem:[%s1 + $0x18] sm:$0xff]
  %v56 = vld [vmem:[%s1 + $0x20] sm:$0xff]
  %v57 = vld [vmem:[%s1 + $0x28] sm:$0xff]
  %v58 = vld [vmem:[%s1 + $0x30] sm:$0xff]
  %v59 = vld [vmem:[%s1 + $0x38] sm:$0xff]
  %v60 = vld [vmem:[%s1 + $0x40] sm:$0xff]
  %v61 = vld [vmem:[%s1 + $0x48] sm:$0xff]
  %v62 = vld [vmem:[%s1 + $0x50] sm:$0xff]
  %v63 = vld [vmem:[%s1 + $0x58] sm:$0xff]
  %v64 = vld [vmem:[%s1 + $0x60] sm:$0xff]
  %v65 = vld [vmem:[%s1 + $0x68] sm:$0xff]
  %v66 = vld [vmem:[%s1 + $0x70] sm:$0xff]
  %v67 = vld [vmem:[%s1 + $0x78] sm:$0xff]
  %v68 = vld [vmem:[%s2] sm:$0xff]
  %v69 = vld [vmem:[%s2 + $0x8] sm:$0xff]
  %v70 = vld [vmem:[%s2 + $0x10] sm:$0xff]
  %v71 = vld [vmem:[%s2 + $0x18] sm:$0xff]
  %v72 = vld [vmem:[%s2 + $0x20] sm:$0xff]
  %v73 = vld [vmem:[%s2 + $0x28] sm:$0xff]
  %v74 = vld [vmem:[%s2 + $0x30] sm:$0xff]
  %v75 = vld [vmem:[%s2 + $0x38] sm:$0xff]
  %v76 = vld [vmem:[%s2 + $0x40] sm:$0xff]
  %v77 = vld [vmem:[%s2 + $0x48] sm:$0xff]
  %v78 = vld [vmem:[%s2 + $0x50] sm:$0xff]
  %v79 = vld [vmem:[%s2 + $0x58] sm:$0xff]
  %v80 = vld [vmem:[%s2 + $0x60] sm:$0xff]
  %v81 = vld [vmem:[%s2 + $0x68] sm:$0xff]
  %v82 = vld [vmem:[%s2 + $0x70] sm:$0xff]
  %v83 = vld [vmem:[%s2 + $0x78] sm:$0xff]
  %v100 = vunpack.c.l.b16 %v52
  %v101 = vunpack.c.h.b16 %v52
  %v102 = vunpack.c.l.b16 %v53
  %v103 = vunpack.c.h.b16 %v53
  %v104 = vunpack.c.l.b16 %v54
  %v105 = vunpack.c.h.b16 %v54
  %v106 = vunpack.c.l.b16 %v55
  %v107 = vunpack.c.h.b16 %v55
  %v108 = vunpack.c.l.b16 %v56
  %v109 = vunpack.c.h.b16 %v56
  %v110 = vunpack.c.l.b16 %v57
  %v111 = vunpack.c.h.b16 %v57
  %v112 = vunpack.c.l.b16 %v58
  %v113 = vunpack.c.h.b16 %v58
  %v114 = vunpack.c.l.b16 %v59
  %v115 = vunpack.c.h.b16 %v59
  %v116 = vunpack.c.l.b16 %v60
  %v117 = vunpack.c.h.b16 %v60
  %v118 = vunpack.c.l.b16 %v61
  %v119 = vunpack.c.h.b16 %v61
  %v120 = vunpack.c.l.b16 %v62
  %v121 = vunpack.c.h.b16 %v62
  %v122 = vunpack.c.l.b16 %v63
  %v123 = vunpack.c.h.b16 %v63
  %v124 = vunpack.c.l.b16 %v64
  %v125 = vunpack.c.h.b16 %v64
  %v126 = vunpack.c.l.b16 %v65
  %v127 = vunpack.c.h.b16 %v65
  %v128 = vunpack.c.l.b16 %v66
  %v129 = vunpack.c.h.b16 %v66
  %v130 = vunpack.c.l.b16 %v67
  %v131 = vunpack.c.h.b16 %v67
  %v132 = vpack.c.b16 %v102, %v100
  %v133 = vpack.c.b16 %v103, %v101
  %v134 = vpack.c.b16 %v106, %v104
  %v135 = vpack.c.b16 %v107, %v105
  %v136 = vpack.c.b16 %v110, %v108
  %v137 = vpack.c.b16 %v111, %v109
  %v138 = vpack.c.b16 %v114, %v112
  %v139 = vpack.c.b16 %v115, %v113
  %v140 = vpack.c.b16 %v118, %v116
  %v141 = vpack.c.b16 %v119, %v117
  %v142 = vpack.c.b16 %v122, %v120
  %v143 = vpack.c.b16 %v123, %v121
  %v144 = vpack.c.b16 %v126, %v124
  %v145 = vpack.c.b16 %v127, %v125
  %v146 = vpack.c.b16 %v130, %v128
  %v147 = vpack.c.b16 %v131, %v129
  %164 = vmatprep.subr.bf16.mxu0 %v133
  %165 = vmatpush1.bf16.msra.mxu0 %v132
  %166 = vmatprep.subr.bf16.mxu0 %v135
  %167 = vmatpush1.bf16.msra.mxu0 %v134
  %168 = vmatprep.subr.bf16.mxu0 %v137
  %169 = vmatpush1.bf16.msra.mxu0 %v136
  %170 = vmatprep.subr.bf16.mxu0 %v139
  %171 = vmatpush1.bf16.msra.mxu0 %v138
  %172 = vmatprep.subr.bf16.mxu0 %v141
  %173 = vmatpush1.bf16.msra.mxu0 %v140
  %174 = vmatprep.subr.bf16.mxu0 %v143
  %175 = vmatpush1.bf16.msra.mxu0 %v142
  %176 = vmatprep.subr.bf16.mxu0 %v145
  %177 = vmatpush1.bf16.msra.mxu0 %v144
  %178 = vmatprep.subr.bf16.mxu0 %v147
  %179 = vmatpush1.bf16.msra.mxu0 %v146
  %180 = vmatprep.subr.bf16.mxu0 0
  %181 = vmatpush1.bf16.msra.mxu0 0
  %182 = vmatprep.subr.bf16.mxu0 0
  %183 = vmatpush1.bf16.msra.mxu0 0
  %184 = vmatprep.subr.bf16.mxu0 0
  %185 = vmatpush1.bf16.msra.mxu0 0
  %186 = vmatprep.subr.bf16.mxu0 0
  %187 = vmatpush1.bf16.msra.mxu0 0
  %188 = vmatprep.subr.bf16.mxu0 0
  %189 = vmatpush1.bf16.msra.mxu0 0
  %190 = vmatprep.subr.bf16.mxu0 0
  %191 = vmatpush1.bf16.msra.mxu0 0
  %192 = vmatprep.subr.bf16.mxu0 0
  %193 = vmatpush1.bf16.msra.mxu0 0
  %194 = vmatprep.subr.bf16.mxu0 0
  %195 = vmatpush1.bf16.msra.mxu0 0
  %196 = vmatprep.mubr.bf16.mxu0 0
  %197 = vmatmul.mubr.bf16.gmra.mrb[0].mxu0 %v47
  %v198 = vpop.f32.mrb[0].mxu0
  %v199 = vadd.f32 0.0, %v198
  %v200 = vpop.f32.mrb[0].mxu0
  %v201 = vadd.f32 0.0, %v200
  %v202 = vpop.f32.mrb[0].mxu0
  %v203 = vadd.f32 0.0, %v202
  %v204 = vpop.f32.mrb[0].mxu0
  %v205 = vadd.f32 0.0, %v204
  %206 = vmatprep.mubr.bf16.mxu0 0
  %207 = vmatmul.mubr.bf16.gmra.mrb[0].mxu0 %v48
  %v208 = vpop.f32.mrb[0].mxu0
  %v209 = vadd.f32 0.0, %v208
  %v210 = vpop.f32.mrb[0].mxu0
  %v211 = vadd.f32 0.0, %v210
  %v212 = vpop.f32.mrb[0].mxu0
  %v213 = vadd.f32 0.0, %v212
  %v214 = vpop.f32.mrb[0].mxu0
  %v215 = vadd.f32 0.0, %v214
  %216 = vmatprep.mubr.bf16.mxu0 0
  %217 = vmatmul.mubr.bf16.gmra.mrb[0].mxu0 %v49
  %v218 = vpop.f32.mrb[0].mxu0
  %v219 = vadd.f32 0.0, %v218
  %v220 = vpop.f32.mrb[0].mxu0
  %v221 = vadd.f32 0.0, %v220
  %v222 = vpop.f32.mrb[0].mxu0
  %v223 = vadd.f32 0.0, %v222
  %v224 = vpop.f32.mrb[0].mxu0
  %v225 = vadd.f32 0.0, %v224
  %226 = vmatprep.mubr.bf16.mxu0 0
  %227 = vmatmul.mubr.bf16.gmra.mrb[0].mxu0 %v50
  %v228 = vpop.f32.mrb[0].mxu0
  %v229 = vadd.f32 0.0, %v228
  %v230 = vpop.f32.mrb[0].mxu0
  %v231 = vadd.f32 0.0, %v230
  %v232 = vpop.f32.mrb[0].mxu0
  %v233 = vadd.f32 0.0, %v232
  %v234 = vpop.f32.mrb[0].mxu0
  %v235 = vadd.f32 0.0, %v234
  %236 = vmatprep.mubr.bf16.mxu0 0
  %237 = vmatmul.mubr.bf16.gmra.mrb[0].mxu0 %v51
  %v238 = vpop.f32.mrb[0].mxu0
  %v239 = vadd.f32 0.0, %v238
  %v240 = vpop.f32.mrb[0].mxu0
  %v241 = vadd.f32 0.0, %v240
  %v242 = vpop.f32.mrb[0].mxu0
  %v243 = vpop.f32.mrb[0].mxu0
  %244 = vdwg.mxu0
  %245 = vmatprep.subr.bf16.mxu0 %v133
  %246 = vmatpush1.bf16.msra.mxu0 %v132
  %247 = vmatprep.subr.bf16.mxu0 %v135
  %248 = vmatpush1.bf16.msra.mxu0 %v134
  %249 = vmatprep.subr.bf16.mxu0 %v137
  %250 = vmatpush1.bf16.msra.mxu0 %v136
  %251 = vmatprep.subr.bf16.mxu0 %v139
  %252 = vmatpush1.bf16.msra.mxu0 %v138
  %253 = vmatprep.subr.bf16.mxu0 %v141
  %254 = vmatpush1.bf16.msra.mxu0 %v140
  %255 = vmatprep.subr.bf16.mxu0 %v143
  %256 = vmatpush1.bf16.msra.mxu0 %v142
  %257 = vmatprep.subr.bf16.mxu0 %v145
  %258 = vmatpush1.bf16.msra.mxu0 %v144
  %259 = vmatprep.subr.bf16.mxu0 %v147
  %260 = vmatpush1.bf16.msra.mxu0 %v146
  %261 = vmatprep.subr.bf16.mxu0 0
  %262 = vmatpush1.bf16.msra.mxu0 0
  %263 = vmatprep.subr.bf16.mxu0 0
  %264 = vmatpush1.bf16.msra.mxu0 0
  %265 = vmatprep.subr.bf16.mxu0 0
  %266 = vmatpush1.bf16.msra.mxu0 0
  %267 = vmatprep.subr.bf16.mxu0 0
  %268 = vmatpush1.bf16.msra.mxu0 0
  %269 = vmatprep.subr.bf16.mxu0 0
  %270 = vmatpush1.bf16.msra.mxu0 0
  %271 = vmatprep.subr.bf16.mxu0 0
  %272 = vmatpush1.bf16.msra.mxu0 0
  %273 = vmatprep.subr.bf16.mxu0 0
  %274 = vmatpush1.bf16.msra.mxu0 0
  %275 = vmatprep.subr.bf16.mxu0 0
  %276 = vmatpush1.bf16.msra.mxu0 0
  %277 = vmatprep.mubr.bf16.mxu0 0
  %278 = vmatmul.mubr.bf16.gmra.mrb[0].mxu0 %v24
  %v279 = vpop.f32.mrb[0].mxu0
  %v280 = vadd.f32 %v199, %v279
  %v281 = vpop.f32.mrb[0].mxu0
  %v282 = vadd.f32 %v201, %v281
  %v283 = vpop.f32.mrb[0].mxu0
  %v284 = vadd.f32 %v203, %v283
  %v285 = vpop.f32.mrb[0].mxu0
  %v286 = vadd.f32 %v205, %v285
  %287 = vmatprep.mubr.bf16.mxu0 0
  %288 = vmatmul.mubr.bf16.gmra.mrb[0].mxu0 %v25
  %v289 = vpop.f32.mrb[0].mxu0
  %v290 = vadd.f32 %v209, %v289
  %v291 = vpop.f32.mrb[0].mxu0
  %v292 = vadd.f32 %v211, %v291
  %v293 = vpop.f32.mrb[0].mxu0
  %v294 = vadd.f32 %v213, %v293
  %v295 = vpop.f32.mrb[0].mxu0
  %v296 = vadd.f32 %v215, %v295
  %297 = vmatprep.mubr.bf16.mxu0 0
  %298 = vmatmul.mubr.bf16.gmra.mrb[0].mxu0 %v26
  %v299 = vpop.f32.mrb[0].mxu0
  %v300 = vadd.f32 %v219, %v299
  %v301 = vpop.f32.mrb[0].mxu0
  %v302 = vadd.f32 %v221, %v301
  %v303 = vpop.f32.mrb[0].mxu0
  %v304 = vadd.f32 %v223, %v303
  %v305 = vpop.f32.mrb[0].mxu0
  %v306 = vadd.f32 %v225, %v305
  %307 = vmatprep.mubr.bf16.mxu0 0
  %308 = vmatmul.mubr.bf16.gmra.mrb[0].mxu0 %v27
  %v309 = vpop.f32.mrb[0].mxu0
  %v310 = vadd.f32 %v229, %v309
  %v311 = vpop.f32.mrb[0].mxu0
  %v312 = vadd.f32 %v231, %v311
  %v313 = vpop.f32.mrb[0].mxu0
  %v314 = vadd.f32 %v233, %v313
  %v315 = vpop.f32.mrb[0].mxu0
  %v316 = vadd.f32 %v235, %v315
  %317 = vmatprep.mubr.bf16.mxu0 0
  %318 = vmatmul.mubr.bf16.gmra.mrb[0].mxu0 %v28
  %v319 = vpop.f32.mrb[0].mxu0
  %v320 = vadd.f32 %v239, %v319
  %v321 = vpop.f32.mrb[0].mxu0
  %v322 = vadd.f32 %v241, %v321
  %v323 = vpop.f32.mrb[0].mxu0
  %v324 = vpop.f32.mrb[0].mxu0
  %325 = vdwg.mxu0
  %v342 = vunpack.c.l.b16 %v68
  %v343 = vunpack.c.h.b16 %v68
  %v344 = vunpack.c.l.b16 %v69
  %v345 = vunpack.c.h.b16 %v69
  %v346 = vunpack.c.l.b16 %v70
  %v347 = vunpack.c.h.b16 %v70
  %v348 = vunpack.c.l.b16 %v71
  %v349 = vunpack.c.h.b16 %v71
  %v350 = vunpack.c.l.b16 %v72
  %v351 = vunpack.c.h.b16 %v72
  %v352 = vunpack.c.l.b16 %v73
  %v353 = vunpack.c.h.b16 %v73
  %v354 = vunpack.c.l.b16 %v74
  %v355 = vunpack.c.h.b16 %v74
  %v356 = vunpack.c.l.b16 %v75
  %v357 = vunpack.c.h.b16 %v75
  %v358 = vunpack.c.l.b16 %v76
  %v359 = vunpack.c.h.b16 %v76
  %v360 = vunpack.c.l.b16 %v77
  %v361 = vunpack.c.h.b16 %v77
  %v362 = vunpack.c.l.b16 %v78
  %v363 = vunpack.c.h.b16 %v78
  %v364 = vunpack.c.l.b16 %v79
  %v365 = vunpack.c.h.b16 %v79
  %v366 = vunpack.c.l.b16 %v80
  %v367 = vunpack.c.h.b16 %v80
  %v368 = vunpack.c.l.b16 %v81
  %v369 = vunpack.c.h.b16 %v81
  %v370 = vunpack.c.l.b16 %v82
  %v371 = vunpack.c.h.b16 %v82
  %v372 = vunpack.c.l.b16 %v83
  %v373 = vunpack.c.h.b16 %v83
  %v374 = vpack.c.b16 %v344, %v342
  %v375 = vpack.c.b16 %v345, %v343
  %v376 = vpack.c.b16 %v348, %v346
  %v377 = vpack.c.b16 %v349, %v347
  %v378 = vpack.c.b16 %v352, %v350
  %v379 = vpack.c.b16 %v353, %v351
  %v380 = vpack.c.b16 %v356, %v354
  %v381 = vpack.c.b16 %v357, %v355
  %v382 = vpack.c.b16 %v360, %v358
  %v383 = vpack.c.b16 %v361, %v359
  %v384 = vpack.c.b16 %v364, %v362
  %v385 = vpack.c.b16 %v365, %v363
  %v386 = vpack.c.b16 %v368, %v366
  %v387 = vpack.c.b16 %v369, %v367
  %v388 = vpack.c.b16 %v372, %v370
  %v389 = vpack.c.b16 %v373, %v371
  %406 = vmatprep.subr.bf16.mxu0 %v375
  %407 = vmatpush1.bf16.msra.mxu0 %v374
  %408 = vmatprep.subr.bf16.mxu0 %v377
  %409 = vmatpush1.bf16.msra.mxu0 %v376
  %410 = vmatprep.subr.bf16.mxu0 %v379
  %411 = vmatpush1.bf16.msra.mxu0 %v378
  %412 = vmatprep.subr.bf16.mxu0 %v381
  %413 = vmatpush1.bf16.msra.mxu0 %v380
  %414 = vmatprep.subr.bf16.mxu0 %v383
  %415 = vmatpush1.bf16.msra.mxu0 %v382
  %416 = vmatprep.subr.bf16.mxu0 %v385
  %417 = vmatpush1.bf16.msra.mxu0 %v384
  %418 = vmatprep.subr.bf16.mxu0 %v387
  %419 = vmatpush1.bf16.msra.mxu0 %v386
  %420 = vmatprep.subr.bf16.mxu0 %v389
  %421 = vmatpush1.bf16.msra.mxu0 %v388
  %422 = vmatprep.subr.bf16.mxu0 0
  %423 = vmatpush1.bf16.msra.mxu0 0
  %424 = vmatprep.subr.bf16.mxu0 0
  %425 = vmatpush1.bf16.msra.mxu0 0
  %426 = vmatprep.subr.bf16.mxu0 0
  %427 = vmatpush1.bf16.msra.mxu0 0
  %428 = vmatprep.subr.bf16.mxu0 0
  %429 = vmatpush1.bf16.msra.mxu0 0
  %430 = vmatprep.subr.bf16.mxu0 0
  %431 = vmatpush1.bf16.msra.mxu0 0
  %432 = vmatprep.subr.bf16.mxu0 0
  %433 = vmatpush1.bf16.msra.mxu0 0
  %434 = vmatprep.subr.bf16.mxu0 0
  %435 = vmatpush1.bf16.msra.mxu0 0
  %436 = vmatprep.subr.bf16.mxu0 0
  %437 = vmatpush1.bf16.msra.mxu0 0
  %438 = vmatprep.mubr.bf16.mxu0 0
  %439 = vmatmul.mubr.bf16.gmra.mrb[0].mxu0 %v24
  %v440 = vpop.f32.mrb[0].mxu0
  %v441 = vadd.f32 0.0, %v440
  %v442 = vpop.f32.mrb[0].mxu0
  %v443 = vadd.f32 0.0, %v442
  %v444 = vpop.f32.mrb[0].mxu0
  %v445 = vadd.f32 0.0, %v444
  %v446 = vpop.f32.mrb[0].mxu0
  %v447 = vadd.f32 0.0, %v446
  %448 = vmatprep.mubr.bf16.mxu0 0
  %449 = vmatmul.mubr.bf16.gmra.mrb[0].mxu0 %v25
  %v450 = vpop.f32.mrb[0].mxu0
  %v451 = vadd.f32 0.0, %v450
  %v452 = vpop.f32.mrb[0].mxu0
  %v453 = vadd.f32 0.0, %v452
  %v454 = vpop.f32.mrb[0].mxu0
  %v455 = vadd.f32 0.0, %v454
  %v456 = vpop.f32.mrb[0].mxu0
  %v457 = vadd.f32 0.0, %v456
  %458 = vmatprep.mubr.bf16.mxu0 0
  %459 = vmatmul.mubr.bf16.gmra.mrb[0].mxu0 %v26
  %v460 = vpop.f32.mrb[0].mxu0
  %v461 = vadd.f32 0.0, %v460
  %v462 = vpop.f32.mrb[0].mxu0
  %v463 = vadd.f32 0.0, %v462
  %v464 = vpop.f32.mrb[0].mxu0
  %v465 = vadd.f32 0.0, %v464
  %v466 = vpop.f32.mrb[0].mxu0
  %v467 = vadd.f32 0.0, %v466
  %468 = vmatprep.mubr.bf16.mxu0 0
  %469 = vmatmul.mubr.bf16.gmra.mrb[0].mxu0 %v27
  %v470 = vpop.f32.mrb[0].mxu0
  %v471 = vadd.f32 0.0, %v470
  %v472 = vpop.f32.mrb[0].mxu0
  %v473 = vadd.f32 0.0, %v472
  %v474 = vpop.f32.mrb[0].mxu0
  %v475 = vadd.f32 0.0, %v474
  %v476 = vpop.f32.mrb[0].mxu0
  %v477 = vadd.f32 0.0, %v476
  %478 = vmatprep.mubr.bf16.mxu0 0
  %479 = vmatmul.mubr.bf16.gmra.mrb[0].mxu0 %v28
  %v480 = vpop.f32.mrb[0].mxu0
  %v481 = vadd.f32 0.0, %v480
  %v482 = vpop.f32.mrb[0].mxu0
  %v483 = vadd.f32 0.0, %v482
  %v484 = vpop.f32.mrb[0].mxu0
  %v485 = vpop.f32.mrb[0].mxu0
  %486 = vdwg.mxu0
  %v487 = vadd.f32 %v280, %v441
  %v488 = vadd.f32 %v282, %v443
  %v489 = vadd.f32 %v284, %v445
  %v490 = vadd.f32 %v286, %v447
  %v491 = vadd.f32 %v290, %v451
  %v492 = vadd.f32 %v292, %v453
  %v493 = vadd.f32 %v294, %v455
  %v494 = vadd.f32 %v296, %v457
  %v495 = vadd.f32 %v300, %v461
  %v496 = vadd.f32 %v302, %v463
  %v497 = vadd.f32 %v304, %v465
  %v498 = vadd.f32 %v306, %v467
  %v499 = vadd.f32 %v310, %v471
  %v500 = vadd.f32 %v312, %v473
  %v501 = vadd.f32 %v314, %v475
  %v502 = vadd.f32 %v316, %v477
  %v503 = vadd.f32 %v320, %v481
  %v504 = vadd.f32 %v322, %v483
  %505 = vst [vmem:[%s3] sm:$0xff] %v487
  %506 = vst [vmem:[%s3 + $0x8] sm:$0xff] %v488
  %507 = vst [vmem:[%s3 + $0x10] sm:$0xff] %v489
  %508 = vst [vmem:[%s3 + $0x18] sm:$0xff] %v490
  %509 = vst [vmem:[%s3 + $0x20] sm:$0xff] %v491
  %510 = vst [vmem:[%s3 + $0x28] sm:$0xff] %v492
  %511 = vst [vmem:[%s3 + $0x30] sm:$0xff] %v493
  %512 = vst [vmem:[%s3 + $0x38] sm:$0xff] %v494
  %513 = vst [vmem:[%s3 + $0x40] sm:$0xff] %v495
  %514 = vst [vmem:[%s3 + $0x48] sm:$0xff] %v496
  %515 = vst [vmem:[%s3 + $0x50] sm:$0xff] %v497
  %516 = vst [vmem:[%s3 + $0x58] sm:$0xff] %v498
  %517 = vst [vmem:[%s3 + $0x60] sm:$0xff] %v499
  %518 = vst [vmem:[%s3 + $0x68] sm:$0xff] %v500
  %519 = vst [vmem:[%s3 + $0x70] sm:$0xff] %v501
  %520 = vst [vmem:[%s3 + $0x78] sm:$0xff] %v502
  %521 = vst [vmem:[%s3 + $0x80] sm:$0xff] %v503
  %522 = vst [vmem:[%s3 + $0x88] sm:$0xff] %v504
  // Predicated region
  $region14: #{vectorized_stft.1} parent=0 // pred_check
    _
  $region15: #{vectorized_stft.1} parent=0 // pred_check_branch
    %524 = sbr.rel (0) target = $region17
  $region16: #{vectorized_stft.1} parent=0 // pred_region
    _
  $region17: #{vectorized_stft.1} parent=0 // pred_fallthru
    _
  // Predicated region
  $region18: #{vectorized_stft.1} parent=0 // pred_check
    _
  $region19: #{vectorized_stft.1} parent=0 // pred_check_branch
    %526 = sbr.rel (0) target = $region21
  $region20: #{vectorized_stft.1} parent=0 // pred_region
    _
  $region21: #{vectorized_stft.1} parent=0 // pred_fallthru
    _

</llo_original>
